<compile_context>
chip_gen: v5e
topology: v5e:2x2
jax: 0.10.0
libtpu: 0.0.40
codegen_flags: <defaults>
</compile_context>

<pallas_src>
import functools

import jax
import jax.numpy as jnp
from jax.experimental import pallas as pl
from jax.experimental.pallas import tpu as pltpu

_LANE = 128
_BF16_SUBLANE_TILE = 16  # bf16 vreg = 16 sublanes x 128 lanes


def _round_up(n, m):
    return ((n + m - 1) // m) * m


def _dqn_kernel(x_ref, w1_ref, b1_ref, w2_ref, b2_ref, w3_ref, b3_ref, out_ref):
    cdt = w1_ref.dtype  # MXU operand dtype (bf16 or f32); accumulation is f32.
    # In-kernel cast (VPU) — avoids a separate XLA cast pass over x in HBM.
    x = x_ref[...].astype(cdt)
    h1 = jnp.dot(x, w1_ref[...], preferred_element_type=jnp.float32) + b1_ref[...]
    h1 = jnp.maximum(h1, 0.0).astype(cdt)
    h2 = jnp.dot(h1, w2_ref[...], preferred_element_type=jnp.float32) + b2_ref[...]
    h2 = jnp.maximum(h2, 0.0).astype(cdt)
    # Lane-dense matmul (w3 padded to 128 output lanes), then slice to the logical
    # output width so the HBM store is only out_dim f32 per row (~21x fewer bytes).
    res = jnp.dot(h2, w3_ref[...], preferred_element_type=jnp.float32)
    out_ref[...] = (res[:, : out_ref.shape[1]] + b3_ref[...]).astype(out_ref.dtype)


def prepare_params(params, compute_dtype=jnp.bfloat16):
    """One-time weight prep: pad hidden2/output feature dims to 128 lanes and cast
    MXU operands to compute_dtype (biases stay f32). Call once, reuse every step."""
    h2_dim = params["w2"].shape[1]
    out_dim = params["w3"].shape[1]
    h2_p = _round_up(h2_dim, _LANE)
    out_p = _round_up(out_dim, _LANE)
    return {
        "w1": params["w1"].astype(compute_dtype),
        "b1": params["b1"].astype(jnp.float32),
        "w2": jnp.pad(params["w2"], ((0, 0), (0, h2_p - h2_dim))).astype(compute_dtype),
        "b2": jnp.pad(params["b2"], ((0, 0), (0, h2_p - h2_dim))).astype(jnp.float32),
        "w3": jnp.pad(
            params["w3"], ((0, h2_p - h2_dim), (0, out_p - out_dim))
        ).astype(compute_dtype),
        # b3 stays unpadded: its width is the logical output width.
        "b3": params["b3"].astype(jnp.float32),
    }


@functools.partial(jax.jit, static_argnames=("block_b",))
def dqn_forward(x, prep, *, block_b=4096):
    """x: (B, input_dim) float32. prep: output of prepare_params()."""
    B, in_dim = x.shape
    w1, b1, w2, b2, w3, b3 = (
        prep["w1"], prep["b1"], prep["w2"], prep["b2"], prep["w3"], prep["b3"])
    h1_p = w1.shape[1]          # 128
    h2_p = w2.shape[1]          # 128 (padded)
    out_p = w3.shape[1]         # padded (128-lane) matmul width
    out_dim = b3.shape[1]       # logical output width (narrow HBM store)
    itemsize = jnp.dtype(w1.dtype).itemsize

    # Live-VMEM estimate per batch row (double-buffered x/out tiles, f32 + cdt
    # copies of h1/h2, padded f32 matmul result) + resident weights.
    per_row = (2 * in_dim * 4
               + h1_p * (4 + itemsize)
               + h2_p * (4 + itemsize)
               + out_p * 4
               + 2 * out_dim * 4)
    weight_bytes = 2 * (itemsize * (in_dim * h1_p + h1_p * h2_p + h2_p * out_p)
                        + 4 * (h1_p + h2_p + out_dim))

    # Batch tile: big (amortizes ~0.35us/step overhead), multiple of 16 (bf16
    # sublane tile), capped so live VMEM stays comfortably under v7x's 64 MiB.
    budget = 44 << 20
    max_tb = max(16, (budget // 2 - weight_bytes) // per_row)
    tb = min(block_b, _round_up(B, _BF16_SUBLANE_TILE), max_tb)
    tb = max(_BF16_SUBLANE_TILE, (tb // _BF16_SUBLANE_TILE) * _BF16_SUBLANE_TILE)

    # Explicit scoped-VMEM limit: v5e default is 16 MiB (too small for big tiles);
    # 32-48 MiB is safe on v5e/v6e (128 MiB physical) and v7x (64 MiB physical).
    vmem_limit = int(min(48 << 20, max(32 << 20, 2 * (tb * per_row + weight_bytes))))

    # No jnp.pad of x: Pallas handles the partial trailing block; rows are
    # independent so garbage rows in the last block cannot leak, and OOB output
    # rows are masked on writeback.
    grid = (pl.cdiv(B, tb),)

    out = pl.pallas_call(
        _dqn_kernel,
        out_shape=jax.ShapeDtypeStruct((B, out_dim), jnp.float32),
        grid=grid,
        in_specs=[
            # x: tiled over batch only; feature dim (small) deliberately NOT padded.
            pl.BlockSpec((tb, in_dim), lambda i: (i, 0)),
            # Weights/biases: constant block index -> VMEM-resident across grid steps.
            pl.BlockSpec(w1.shape, lambda i: (0, 0)),
            pl.BlockSpec(b1.shape, lambda i: (0, 0)),
            pl.BlockSpec(w2.shape, lambda i: (0, 0)),
            pl.BlockSpec(b2.shape, lambda i: (0, 0)),
            pl.BlockSpec(w3.shape, lambda i: (0, 0)),
            pl.BlockSpec(b3.shape, lambda i: (0, 0)),
        ],
        # Narrow output store: out_dim f32 per row (dominant HBM stream shrunk ~21x).
        out_specs=pl.BlockSpec((tb, out_dim), lambda i: (i, 0)),
        compiler_params=pltpu.CompilerParams(
            # "parallel" only matters on v7x (2 TCs); no-op on v5e/v6e.
            dimension_semantics=("parallel",),
            vmem_limit_bytes=vmem_limit,
        ),
    )(x, w1, b1, w2, b2, w3, b3)
    return out


def init_dqn_params(key, input_dim, output_dim):
    """Mimics torch.nn.Linear default init: U[-1/sqrt(fan_in), 1/sqrt(fan_in)]."""
    dims = [(input_dim, 128), (128, 64), (64, output_dim)]
    params = {}
    for i, (fan_in, fan_out) in enumerate(dims, start=1):
        key, kw, kb = jax.random.split(key, 3)
        bound = 1.0 / (fan_in ** 0.5)
        params[f"w{i}"] = jax.random.uniform(
            kw, (fan_in, fan_out), jnp.float32, -bound, bound)
        params[f"b{i}"] = jax.random.uniform(
            kb, (1, fan_out), jnp.float32, -bound, bound)
    return params


def dqn_reference(x, p):
    h1 = jnp.maximum(x @ p["w1"] + p["b1"], 0.0)
    h2 = jnp.maximum(h1 @ p["w2"] + p["b2"], 0.0)
    return h2 @ p["w3"] + p["b3"]


if __name__ == "__main__":
    key = jax.random.PRNGKey(0)
    batch, input_dim, output_dim = 64, 12, 6  # typical GlobalRoutingRL state/action dims

    kx, kp = jax.random.split(key)
    x = jax.random.normal(kx, (batch, input_dim), jnp.float32)
    params = init_dqn_params(kp, input_dim, output_dim)

    ref = dqn_reference(x, params)

    # Exact f32 path.
    prep_f32 = prepare_params(params, compute_dtype=jnp.float32)
    out_f32 = jax.block_until_ready(dqn_forward(x, prep_f32))
    assert out_f32.shape == (batch, output_dim)
    assert jnp.allclose(out_f32, ref, atol=1e-4, rtol=1e-4)

    # bf16-operand / f32-accumulate fast path (default on all generations; v5e's MXU
    # is natively bf16 too — f32 operands would force multi-pass emulation).
    prep_bf16 = prepare_params(params)
    out_bf16 = jax.block_until_ready(dqn_forward(x, prep_bf16))
    assert out_bf16.shape == (batch, output_dim)
    assert jnp.allclose(out_bf16, ref, atol=1e-1, rtol=5e-2)

    print("KERNEL_OK")
</pallas_src>

<mosaic_0001>
module attributes {stable_mosaic.version = 11 : i64} {
  func.func @_dqn_kernel(%arg0: i32, %arg1: memref<64x12xf32, #tpu.memory_space<vmem>>, %arg2: memref<12x128xf32, #tpu.memory_space<vmem>>, %arg3: memref<1x128xf32, #tpu.memory_space<vmem>>, %arg4: memref<128x128xf32, #tpu.memory_space<vmem>>, %arg5: memref<1x128xf32, #tpu.memory_space<vmem>>, %arg6: memref<128x128xf32, #tpu.memory_space<vmem>>, %arg7: memref<1x6xf32, #tpu.memory_space<vmem>>, %arg8: memref<64x6xf32, #tpu.memory_space<vmem>>) attributes {dimension_semantics = [#tpu.dimension_semantics<parallel>], iteration_bounds = array<i64: 1>, scalar_prefetch = 0 : i64, scratch_operands = 0 : i64, tpu.core_type = #tpu.core_type<tc>, window_params = [{transform_indices = @transform_0, window_bounds = array<i64: 64, 12>}, {pipeline_mode = #tpu.pipeline_mode<synchronous>, transform_indices = @transform_1, window_bounds = array<i64: 12, 128>}, {pipeline_mode = #tpu.pipeline_mode<synchronous>, transform_indices = @transform_2, window_bounds = array<i64: 1, 128>}, {pipeline_mode = #tpu.pipeline_mode<synchronous>, transform_indices = @transform_3, window_bounds = array<i64: 128, 128>}, {pipeline_mode = #tpu.pipeline_mode<synchronous>, transform_indices = @transform_4, window_bounds = array<i64: 1, 128>}, {pipeline_mode = #tpu.pipeline_mode<synchronous>, transform_indices = @transform_5, window_bounds = array<i64: 128, 128>}, {pipeline_mode = #tpu.pipeline_mode<synchronous>, transform_indices = @transform_6, window_bounds = array<i64: 1, 6>}, {transform_indices = @transform_7, window_bounds = array<i64: 64, 6>}]} {
    %c0 = arith.constant 0 : index
    %c0_0 = arith.constant 0 : index
    %0 = vector.load %arg1[%c0, %c0_0] : memref<64x12xf32, #tpu.memory_space<vmem>>, vector<64x12xf32>
    %c0_1 = arith.constant 0 : index
    %c0_2 = arith.constant 0 : index
    %1 = vector.load %arg2[%c0_1, %c0_2] : memref<12x128xf32, #tpu.memory_space<vmem>>, vector<12x128xf32>
    %cst = arith.constant dense<0.000000e+00> : vector<64x128xf32>
    %2 = tpu.matmul %0, %1, %cst {dimension_numbers = #tpu.dot_dimension_numbers<[1], [0], [0], [1], [0, 0, 1, 1], [], []>} : vector<64x12xf32>, vector<12x128xf32>, vector<64x128xf32> -> vector<64x128xf32>
    %c0_3 = arith.constant 0 : index
    %c0_4 = arith.constant 0 : index
    %3 = vector.load %arg3[%c0_3, %c0_4] : memref<1x128xf32, #tpu.memory_space<vmem>>, vector<1x128xf32>
    %4 = vector.broadcast %3 : vector<1x128xf32> to vector<64x128xf32>
    %5 = arith.addf %2, %4 : vector<64x128xf32>
    %cst_5 = arith.constant 0.000000e+00 : f32
    %6 = vector.broadcast %cst_5 : f32 to vector<64x128xf32>
    %7 = arith.maximumf %5, %6 : vector<64x128xf32>
    %c0_6 = arith.constant 0 : index
    %c0_7 = arith.constant 0 : index
    %8 = vector.load %arg4[%c0_6, %c0_7] : memref<128x128xf32, #tpu.memory_space<vmem>>, vector<128x128xf32>
    %cst_8 = arith.constant dense<0.000000e+00> : vector<64x128xf32>
    %9 = tpu.matmul %7, %8, %cst_8 {dimension_numbers = #tpu.dot_dimension_numbers<[1], [0], [0], [1], [0, 0, 1, 1], [], []>} : vector<64x128xf32>, vector<128x128xf32>, vector<64x128xf32> -> vector<64x128xf32>
    %c0_9 = arith.constant 0 : index
    %c0_10 = arith.constant 0 : index
    %10 = vector.load %arg5[%c0_9, %c0_10] : memref<1x128xf32, #tpu.memory_space<vmem>>, vector<1x128xf32>
    %11 = vector.broadcast %10 : vector<1x128xf32> to vector<64x128xf32>
    %12 = arith.addf %9, %11 : vector<64x128xf32>
    %cst_11 = arith.constant 0.000000e+00 : f32
    %13 = vector.broadcast %cst_11 : f32 to vector<64x128xf32>
    %14 = arith.maximumf %12, %13 : vector<64x128xf32>
    %c0_12 = arith.constant 0 : index
    %c0_13 = arith.constant 0 : index
    %15 = vector.load %arg6[%c0_12, %c0_13] : memref<128x128xf32, #tpu.memory_space<vmem>>, vector<128x128xf32>
    %cst_14 = arith.constant dense<0.000000e+00> : vector<64x128xf32>
    %16 = tpu.matmul %14, %15, %cst_14 {dimension_numbers = #tpu.dot_dimension_numbers<[1], [0], [0], [1], [0, 0, 1, 1], [], []>} : vector<64x128xf32>, vector<128x128xf32>, vector<64x128xf32> -> vector<64x128xf32>
    %17 = vector.extract_strided_slice %16 {offsets = [0, 0], sizes = [64, 6], strides = [1, 1]} : vector<64x128xf32> to vector<64x6xf32>
    %c0_15 = arith.constant 0 : index
    %c0_16 = arith.constant 0 : index
    %18 = vector.load %arg7[%c0_15, %c0_16] : memref<1x6xf32, #tpu.memory_space<vmem>>, vector<1x6xf32>
    %19 = vector.broadcast %18 : vector<1x6xf32> to vector<64x6xf32>
    %20 = arith.addf %17, %19 : vector<64x6xf32>
    %c0_17 = arith.constant 0 : index
    %c0_18 = arith.constant 0 : index
    %21 = vector.load %arg8[%c0_17, %c0_18] : memref<64x6xf32, #tpu.memory_space<vmem>>, vector<64x6xf32>
    tpu.vector_store %arg8[%c0_17, %c0_18], %20 {strides = array<i32>} : memref<64x6xf32, #tpu.memory_space<vmem>>, vector<64x6xf32>,
    return
  }
  func.func @transform_0(%arg0: i32) -> (i32, i32) {
    %c0_i32 = arith.constant 0 : i32
    %c0_i32_0 = arith.constant 0 : i32
    return %arg0, %c0_i32 : i32, i32
  }
  func.func @transform_1(%arg0: i32) -> (i32, i32) {
    %c0_i32 = arith.constant 0 : i32
    %c0_i32_0 = arith.constant 0 : i32
    %c0_i32_1 = arith.constant 0 : i32
    return %c0_i32, %c0_i32_0 : i32, i32
  }
  func.func @transform_2(%arg0: i32) -> (i32, i32) {
    %c0_i32 = arith.constant 0 : i32
    %c0_i32_0 = arith.constant 0 : i32
    %c0_i32_1 = arith.constant 0 : i32
    return %c0_i32, %c0_i32_0 : i32, i32
  }
  func.func @transform_3(%arg0: i32) -> (i32, i32) {
    %c0_i32 = arith.constant 0 : i32
    %c0_i32_0 = arith.constant 0 : i32
    %c0_i32_1 = arith.constant 0 : i32
    return %c0_i32, %c0_i32_0 : i32, i32
  }
  func.func @transform_4(%arg0: i32) -> (i32, i32) {
    %c0_i32 = arith.constant 0 : i32
    %c0_i32_0 = arith.constant 0 : i32
    %c0_i32_1 = arith.constant 0 : i32
    return %c0_i32, %c0_i32_0 : i32, i32
  }
  func.func @transform_5(%arg0: i32) -> (i32, i32) {
    %c0_i32 = arith.constant 0 : i32
    %c0_i32_0 = arith.constant 0 : i32
    %c0_i32_1 = arith.constant 0 : i32
    return %c0_i32, %c0_i32_0 : i32, i32
  }
  func.func @transform_6(%arg0: i32) -> (i32, i32) {
    %c0_i32 = arith.constant 0 : i32
    %c0_i32_0 = arith.constant 0 : i32
    %c0_i32_1 = arith.constant 0 : i32
    return %c0_i32, %c0_i32_0 : i32, i32
  }
  func.func @transform_7(%arg0: i32) -> (i32, i32) {
    %c0_i32 = arith.constant 0 : i32
    %c0_i32_0 = arith.constant 0 : i32
    return %arg0, %c0_i32 : i32, i32
  }
}

</mosaic_0001>

<llo_original>
// kernel: dqn_forward.1
$region0: #{dqn_forward.1}
  #allocation0 [shape = 'u32[]', space=smem, size = 0x4, offset = 0x4, fixed_abs, tag = 'smem constant byte address 0x4 - core index']
  #allocation1 [shape = 'u32[72,128]{1,0:T(1,128)}', space=vmem, size = 0x9000, scoped, tag = 'internal scratch']
  %s0 = inlined_call_operand.vmem [shape: f32[64,12], index: 0, kind: input, shape index: {}]
  %s1 = inlined_call_operand.vmem [shape: f32[12,128], index: 1, kind: input, shape index: {}]
  %s2 = inlined_call_operand.vmem [shape: f32[1,128], index: 2, kind: input, shape index: {}]
  %s3 = inlined_call_operand.hbm [shape: f32[128,128], index: 3, kind: input, shape index: {}]
  %s4 = inlined_call_operand.vmem [shape: f32[1,128], index: 4, kind: input, shape index: {}]
  %s5 = inlined_call_operand.hbm [shape: f32[128,128], index: 5, kind: input, shape index: {}]
  %s6 = inlined_call_operand.vmem [shape: f32[1,6], index: 6, kind: input, shape index: {}]
  %s7 = inlined_call_operand.vmem [shape: f32[64,6], index: 7, kind: output, shape index: {}]
  %s8 = sld [smem:[#allocation0]]
  $region46: #{dqn_forward.1} parent=0
    _
  %s10 = ssub.s32 1, %s8
  %s11 = scalar_select 0, %s10, %s8
  $region1: #{dqn_forward.1} parent=0
    #allocation2 [shape = 'u8[65536]{0}', space=vmem, size = 0x10000, scoped, tag = 'input window, operand 3, single buffered']
    #allocation3 [shape = 's32[1]{0}', space=sflag, size = 0x4, scoped, tag = 'scoped memory for dqn_forward.1']
    #allocation4 [shape = 'u8[65536]{0}', space=vmem, size = 0x10000, scoped, tag = 'input window, operand 5, single buffered']
    #allocation5 [shape = 's32[1]{0}', space=sflag, size = 0x4, scoped, tag = 'scoped memory for dqn_forward.1']
    %12 = vsyncpa [#allocation3], 0
    %13 = vsyncpa [#allocation5], 0
    // Predicated region
    $region2: #{dqn_forward.1} parent=1 // pred_check
      _
    $region3: #{dqn_forward.1} parent=1 // pred_check_branch
      %15 = sbr.rel (0) target = $region5
    $region4: #{dqn_forward.1} parent=1 // pred_region
      _
    $region5: #{dqn_forward.1} parent=1 // pred_fallthru
      _
    // Predicated region
    $region6: #{dqn_forward.1} parent=1 // pred_check
      _
    $region7: #{dqn_forward.1} parent=1 // pred_check_branch
      %17 = sbr.rel (0) target = $region9
    $region8: #{dqn_forward.1} parent=1 // pred_region
      _
    $region9: #{dqn_forward.1} parent=1 // pred_fallthru
      _
    // Predicated region
    $region10: #{dqn_forward.1} parent=1 // pred_check
      _
    $region11: #{dqn_forward.1} parent=1 // pred_check_branch
      %19 = sbr.rel (0) target = $region13
    $region12: #{dqn_forward.1} parent=1 // pred_region
      _
    $region13: #{dqn_forward.1} parent=1 // pred_fallthru
      _
    // Predicated region
    $region14: #{dqn_forward.1} parent=1 // pred_check
      _
    $region15: #{dqn_forward.1} parent=1 // pred_check_branch
      %21 = sbr.rel (0) target = $region17
    $region16: #{dqn_forward.1} parent=1 // pred_region
      %23 = vsyncadd [#allocation3], 0
      %s24 = sshll.u32 %s3, 4
      %s25 = int_to_ptr.hbm [resolvable:$true] %s24
      %s26 = sshll.u32 [#allocation2], 4
      %s27 = int_to_ptr.vmem [resolvable:$true] %s26
      %32 = dma.hbm_to_vmem [thread:$0]  %s25, 2048, %s27, [#allocation3], 128, 128, 8
    $region17: #{dqn_forward.1} parent=1 // pred_fallthru
      _
    // Predicated region
    $region18: #{dqn_forward.1} parent=1 // pred_check
      _
    $region19: #{dqn_forward.1} parent=1 // pred_check_branch
      %34 = sbr.rel (0) target = $region21
    $region20: #{dqn_forward.1} parent=1 // pred_region
      _
    $region21: #{dqn_forward.1} parent=1 // pred_fallthru
      _
    // Predicated region
    $region22: #{dqn_forward.1} parent=1 // pred_check
      _
    $region23: #{dqn_forward.1} parent=1 // pred_check_branch
      %36 = sbr.rel (0) target = $region25
    $region24: #{dqn_forward.1} parent=1 // pred_region
      %38 = vsyncadd [#allocation5], 0
      %s39 = sshll.u32 %s5, 4
      %s40 = int_to_ptr.hbm [resolvable:$true] %s39
      %s41 = sshll.u32 [#allocation4], 4
      %s42 = int_to_ptr.vmem [resolvable:$true] %s41
      %47 = dma.hbm_to_vmem [thread:$0]  %s40, 2048, %s42, [#allocation5], 128, 128, 8
    $region25: #{dqn_forward.1} parent=1 // pred_fallthru
      _
    // Predicated region
    $region26: #{dqn_forward.1} parent=1 // pred_check
      _
    $region27: #{dqn_forward.1} parent=1 // pred_check_branch
      %49 = sbr.rel (0) target = $region29
    $region28: #{dqn_forward.1} parent=1 // pred_region
      _
    $region29: #{dqn_forward.1} parent=1 // pred_fallthru
      _
    // Predicated region
    $region30: #{dqn_forward.1} parent=1 // pred_check
      _
    $region31: #{dqn_forward.1} parent=1 // pred_check_branch
      %51 = sbr.rel (0) target = $region33
    $region32: #{dqn_forward.1} parent=1 // pred_region
      %53 = dma.done [#allocation3], 2048
    $region33: #{dqn_forward.1} parent=1 // pred_fallthru
      _
    // Predicated region
    $region34: #{dqn_forward.1} parent=1 // pred_check
      _
    $region35: #{dqn_forward.1} parent=1 // pred_check_branch
      %55 = sbr.rel (0) target = $region37
    $region36: #{dqn_forward.1} parent=1 // pred_region
      %57 = dma.done [#allocation5], 2048
    $region37: #{dqn_forward.1} parent=1 // pred_fallthru
      _
    %v58 = vld [vmem:[%s0] sm:$0xff]
    %v59 = vld [vmem:[%s0 + $0x8] sm:$0xff]
    %v60 = vld [vmem:[%s0 + $0x10] sm:$0xff]
    %v61 = vld [vmem:[%s0 + $0x18] sm:$0xff]
    %v62 = vld [vmem:[%s0 + $0x20] sm:$0xff]
    %v63 = vld [vmem:[%s0 + $0x28] sm:$0xff]
    %v64 = vld [vmem:[%s0 + $0x30] sm:$0xff]
    %v65 = vld [vmem:[%s0 + $0x38] sm:$0xff]
    %v66 = vld [vmem:[%s1] sm:$0xff]
    %v67 = vld [vmem:[%s1 + $0x8] sm:$0xf]
    %v68 = vld [vmem:[%s2] sm:$0x1]
    %v70 = vperm.slane %v68, 0
    %vm72 = vcmask 97280
    %v74 = vsel %vm72, %v58, 0
    %v77 = vsel %vm72, %v59, 0
    %v80 = vsel %vm72, %v60, 0
    %v83 = vsel %vm72, %v61, 0
    %v86 = vsel %vm72, %v62, 0
    %v89 = vsel %vm72, %v63, 0
    %v92 = vsel %vm72, %v64, 0
    %v95 = vsel %vm72, %v65, 0
    %vm97 = vcmask 1043456
    %v99 = vsel %vm97, %v67, 0
    %101 = vmatpush.msra.mxu0 0.0
    %102 = vmatpush.msra.mxu0 0.0
    %103 = vmatpush.msra.mxu0 0.0
    %104 = vmatpush.msra.mxu0 0.0
    %105 = vmatpush.msra.mxu0 0.0
    %106 = vmatpush.msra.mxu0 0.0
    %107 = vmatpush.msra.mxu0 0.0
    %108 = vmatpush.msra.mxu0 0.0
    %109 = vmatpush.msra.mxu0 0.0
    %110 = vmatpush.msra.mxu0 0.0
    %111 = vmatpush.msra.mxu0 0.0
    %112 = vmatpush.msra.mxu0 0.0
    %113 = vmatpush.msra.mxu0 0.0
    %114 = vmatpush.msra.mxu0 0.0
    %115 = vmatpush.msra.mxu0 %v99
    %116 = vmatpush.msra.mxu0 %v66
    %117 = vmatmul.f32.gmra.mxu0 %v74
    %v118 = vpop.f32.mrf.mxu0
    %v119 = vadd.f32 %v70, %v118
    %120 = vmatmul.f32.gmra.mxu0 %v77
    %v121 = vpop.f32.mrf.mxu0
    %v122 = vadd.f32 %v70, %v121
    %123 = vmatmul.f32.gmra.mxu0 %v80
    %v124 = vpop.f32.mrf.mxu0
    %v125 = vadd.f32 %v70, %v124
    %126 = vmatmul.f32.gmra.mxu0 %v83
    %v127 = vpop.f32.mrf.mxu0
    %v128 = vadd.f32 %v70, %v127
    %129 = vmatmul.f32.gmra.mxu0 %v86
    %v130 = vpop.f32.mrf.mxu0
    %v131 = vadd.f32 %v70, %v130
    %132 = vmatmul.f32.gmra.mxu0 %v89
    %v133 = vpop.f32.mrf.mxu0
    %v134 = vadd.f32 %v70, %v133
    %135 = vmatmul.f32.gmra.mxu0 %v92
    %v136 = vpop.f32.mrf.mxu0
    %v137 = vadd.f32 %v70, %v136
    %138 = vmatmul.f32.gmra.mxu0 %v95
    %v139 = vpop.f32.mrf.mxu0
    %v140 = vadd.f32 %v70, %v139
    %141 = vdwg.mxu0
    %v142 = vmax.f32 %v119, 0.0
    %v143 = vmax.f32 %v122, 0.0
    %v144 = vmax.f32 %v125, 0.0
    %v145 = vmax.f32 %v128, 0.0
    %v146 = vmax.f32 %v131, 0.0
    %v147 = vmax.f32 %v134, 0.0
    %v148 = vmax.f32 %v137, 0.0
    %v149 = vmax.f32 %v140, 0.0
    %v150 = vld [vmem:[#allocation2] sm:$0xff]
    %v151 = vld [vmem:[#allocation2 + $0x8] sm:$0xff]
    %v152 = vld [vmem:[#allocation2 + $0x10] sm:$0xff]
    %v153 = vld [vmem:[#allocation2 + $0x18] sm:$0xff]
    %v154 = vld [vmem:[#allocation2 + $0x20] sm:$0xff]
    %v155 = vld [vmem:[#allocation2 + $0x28] sm:$0xff]
    %v156 = vld [vmem:[#allocation2 + $0x30] sm:$0xff]
    %v157 = vld [vmem:[#allocation2 + $0x38] sm:$0xff]
    %v158 = vld [vmem:[#allocation2 + $0x40] sm:$0xff]
    %v159 = vld [vmem:[#allocation2 + $0x48] sm:$0xff]
    %v160 = vld [vmem:[#allocation2 + $0x50] sm:$0xff]
    %v161 = vld [vmem:[#allocation2 + $0x58] sm:$0xff]
    %v162 = vld [vmem:[#allocation2 + $0x60] sm:$0xff]
    %v163 = vld [vmem:[#allocation2 + $0x68] sm:$0xff]
    %v164 = vld [vmem:[#allocation2 + $0x70] sm:$0xff]
    %v165 = vld [vmem:[#allocation2 + $0x78] sm:$0xff]
    %v166 = vld [vmem:[%s4] sm:$0x1]
    %v168 = vperm.slane %v166, 0
    %170 = vmatpush.msra.mxu0 %v165
    %171 = vmatpush.msra.mxu0 %v164
    %172 = vmatpush.msra.mxu0 %v163
    %173 = vmatpush.msra.mxu0 %v162
    %174 = vmatpush.msra.mxu0 %v161
    %175 = vmatpush.msra.mxu0 %v160
    %176 = vmatpush.msra.mxu0 %v159
    %177 = vmatpush.msra.mxu0 %v158
    %178 = vmatpush.msra.mxu0 %v157
    %179 = vmatpush.msra.mxu0 %v156
    %180 = vmatpush.msra.mxu0 %v155
    %181 = vmatpush.msra.mxu0 %v154
    %182 = vmatpush.msra.mxu0 %v153
    %183 = vmatpush.msra.mxu0 %v152
    %184 = vmatpush.msra.mxu0 %v151
    %185 = vmatpush.msra.mxu0 %v150
    %186 = vmatmul.f32.gmra.mxu0 %v142
    %v187 = vpop.f32.mrf.mxu0
    %v188 = vadd.f32 %v168, %v187
    %189 = vmatmul.f32.gmra.mxu0 %v143
    %v190 = vpop.f32.mrf.mxu0
    %v191 = vadd.f32 %v168, %v190
    %192 = vmatmul.f32.gmra.mxu0 %v144
    %v193 = vpop.f32.mrf.mxu0
    %v194 = vadd.f32 %v168, %v193
    %195 = vmatmul.f32.gmra.mxu0 %v145
    %v196 = vpop.f32.mrf.mxu0
    %v197 = vadd.f32 %v168, %v196
    %198 = vmatmul.f32.gmra.mxu0 %v146
    %v199 = vpop.f32.mrf.mxu0
    %v200 = vadd.f32 %v168, %v199
    %201 = vmatmul.f32.gmra.mxu0 %v147
    %v202 = vpop.f32.mrf.mxu0
    %v203 = vadd.f32 %v168, %v202
    %204 = vmatmul.f32.gmra.mxu0 %v148
    %v205 = vpop.f32.mrf.mxu0
    %v206 = vadd.f32 %v168, %v205
    %207 = vmatmul.f32.gmra.mxu0 %v149
    %v208 = vpop.f32.mrf.mxu0
    %v209 = vadd.f32 %v168, %v208
    %210 = vdwg.mxu0
    %v211 = vmax.f32 %v188, 0.0
    %v212 = vmax.f32 %v191, 0.0
    %v213 = vmax.f32 %v194, 0.0
    %v214 = vmax.f32 %v197, 0.0
    %v215 = vmax.f32 %v200, 0.0
    %v216 = vmax.f32 %v203, 0.0
    %v217 = vmax.f32 %v206, 0.0
    %v218 = vmax.f32 %v209, 0.0
    %v219 = vld [vmem:[#allocation4] sm:$0xff]
    %v220 = vld [vmem:[#allocation4 + $0x8] sm:$0xff]
    %v221 = vld [vmem:[#allocation4 + $0x10] sm:$0xff]
    %v222 = vld [vmem:[#allocation4 + $0x18] sm:$0xff]
    %v223 = vld [vmem:[#allocation4 + $0x20] sm:$0xff]
    %v224 = vld [vmem:[#allocation4 + $0x28] sm:$0xff]
    %v225 = vld [vmem:[#allocation4 + $0x30] sm:$0xff]
    %v226 = vld [vmem:[#allocation4 + $0x38] sm:$0xff]
    %v227 = vld [vmem:[#allocation4 + $0x40] sm:$0xff]
    %v228 = vld [vmem:[#allocation4 + $0x48] sm:$0xff]
    %v229 = vld [vmem:[#allocation4 + $0x50] sm:$0xff]
    %v230 = vld [vmem:[#allocation4 + $0x58] sm:$0xff]
    %v231 = vld [vmem:[#allocation4 + $0x60] sm:$0xff]
    %v232 = vld [vmem:[#allocation4 + $0x68] sm:$0xff]
    %v233 = vld [vmem:[#allocation4 + $0x70] sm:$0xff]
    %v234 = vld [vmem:[#allocation4 + $0x78] sm:$0xff]
    %235 = vmatpush.msra.mxu0 %v234
    %236 = vmatpush.msra.mxu0 %v233
    %237 = vmatpush.msra.mxu0 %v232
    %238 = vmatpush.msra.mxu0 %v231
    %239 = vmatpush.msra.mxu0 %v230
    %240 = vmatpush.msra.mxu0 %v229
    %241 = vmatpush.msra.mxu0 %v228
    %242 = vmatpush.msra.mxu0 %v227
    %243 = vmatpush.msra.mxu0 %v226
    %244 = vmatpush.msra.mxu0 %v225
    %245 = vmatpush.msra.mxu0 %v224
    %246 = vmatpush.msra.mxu0 %v223
    %247 = vmatpush.msra.mxu0 %v222
    %248 = vmatpush.msra.mxu0 %v221
    %249 = vmatpush.msra.mxu0 %v220
    %250 = vmatpush.msra.mxu0 %v219
    %251 = vmatmul.f32.gmra.mxu0 %v211
    %v252 = vpop.f32.mrf.mxu0
    %v253 = vadd.f32 0.0, %v252
    %254 = vmatmul.f32.gmra.mxu0 %v212
    %v255 = vpop.f32.mrf.mxu0
    %v256 = vadd.f32 0.0, %v255
    %257 = vmatmul.f32.gmra.mxu0 %v213
    %v258 = vpop.f32.mrf.mxu0
    %v259 = vadd.f32 0.0, %v258
    %260 = vmatmul.f32.gmra.mxu0 %v214
    %v261 = vpop.f32.mrf.mxu0
    %v262 = vadd.f32 0.0, %v261
    %263 = vmatmul.f32.gmra.mxu0 %v215
    %v264 = vpop.f32.mrf.mxu0
    %v265 = vadd.f32 0.0, %v264
    %266 = vmatmul.f32.gmra.mxu0 %v216
    %v267 = vpop.f32.mrf.mxu0
    %v268 = vadd.f32 0.0, %v267
    %269 = vmatmul.f32.gmra.mxu0 %v217
    %v270 = vpop.f32.mrf.mxu0
    %v271 = vadd.f32 0.0, %v270
    %272 = vmatmul.f32.gmra.mxu0 %v218
    %v273 = vpop.f32.mrf.mxu0
    %v274 = vadd.f32 0.0, %v273
    %275 = vdwg.mxu0
    %v276 = vld [vmem:[%s6] sm:$0x1]
    %v278 = vperm.slane %v276, 0
    %v280 = vadd.f32 %v253, %v278
    %v281 = vadd.f32 %v256, %v278
    %v282 = vadd.f32 %v259, %v278
    %v283 = vadd.f32 %v262, %v278
    %v284 = vadd.f32 %v265, %v278
    %v285 = vadd.f32 %v268, %v278
    %v286 = vadd.f32 %v271, %v278
    %v287 = vadd.f32 %v274, %v278
    %vm288 = vcmask 48128
    %289 = vst.msk [vmem:[%s7] sm:$0xff] %vm288, %v280
    %290 = vst.msk [vmem:[%s7 + $0x8] sm:$0xff] %vm288, %v281
    %291 = vst.msk [vmem:[%s7 + $0x10] sm:$0xff] %vm288, %v282
    %292 = vst.msk [vmem:[%s7 + $0x18] sm:$0xff] %vm288, %v283
    %293 = vst.msk [vmem:[%s7 + $0x20] sm:$0xff] %vm288, %v284
    %294 = vst.msk [vmem:[%s7 + $0x28] sm:$0xff] %vm288, %v285
    %295 = vst.msk [vmem:[%s7 + $0x30] sm:$0xff] %vm288, %v286
    %296 = vst.msk [vmem:[%s7 + $0x38] sm:$0xff] %vm288, %v287
    // Predicated region
    $region38: #{dqn_forward.1} parent=1 // pred_check
      _
    $region39: #{dqn_forward.1} parent=1 // pred_check_branch
      %298 = sbr.rel (0) target = $region41
    $region40: #{dqn_forward.1} parent=1 // pred_region
      _
    $region41: #{dqn_forward.1} parent=1 // pred_fallthru
      _
    // Predicated region
    $region42: #{dqn_forward.1} parent=1 // pred_check
      _
    $region43: #{dqn_forward.1} parent=1 // pred_check_branch
      %300 = sbr.rel (0) target = $region45
    $region44: #{dqn_forward.1} parent=1 // pred_region
      _
    $region45: #{dqn_forward.1} parent=1 // pred_fallthru
      _
    %301 = vsyncpa [#allocation3], 1
    %302 = vsyncpa [#allocation5], 1

</llo_original>
